<compile_context>
chip_gen: v7x
topology: tpu7x:2x2x1
jax: 0.10.0
libtpu: 0.0.40
codegen_flags: <defaults>
</compile_context>

<pallas_src>
import functools

import jax
import jax.numpy as jnp
from jax import lax
from jax.experimental import pallas as pl
from jax.experimental.pallas import tpu as pltpu

B = 2              # demo batch
H = W = 28         # MNIST spatial
KH = KW = 16       # conv kernel
OC = 2             # conv out channels
OH = OW = 13       # conv output spatial (28 - 16 + 1)
P = OH * OW        # 169 output positions per conv channel
F = OC * P         # 338 flattened features into the linear layer
FP = 384           # F padded up to a multiple of 128 lanes
NOUT = 10
HW = H * W         # 784 flattened input pixels


def cnn_kernel(x_ref, wbig_ref, bconv_ref, wlin_ref, blin_ref, out_ref):
    # In-kernel cast to the MXU dtype (avoids materialising a bf16 copy of x in HBM).
    x = x_ref[...].astype(wbig_ref.dtype)                                   # [tb, 784] bf16
    # Conv as one MXU matmul against the precomputed Toeplitz weight: [tb,784] @ [784,384].
    h = jnp.dot(x, wbig_ref[...], preferred_element_type=jnp.float32)
    # Conv bias + ReLU in f32 on the VPU (ReLU-after-flatten == ReLU-before-flatten).
    h = jnp.maximum(h + bconv_ref[...], 0.0)
    # Linear(338 -> 10) as a second MXU matmul: [tb,384] @ [384,10] (padded rows are zero).
    out_ref[...] = (
        jnp.dot(h.astype(wlin_ref.dtype), wlin_ref[...], preferred_element_type=jnp.float32)
        + blin_ref[...]
    ).astype(out_ref.dtype)


def prepare_params(w_conv, b_conv, w_lin, b_lin, mxu_dtype=jnp.bfloat16):
    """One-time weight preprocessing, hoisted off the per-call path.

    Builds the conv-as-matmul weight by pushing every one-hot 28x28 image through the
    (bias-free) conv; the result, flattened channel-major, is exactly the matrix W_big with
    flatten(conv(x), 1) == x.reshape(B, 784) @ W_big.  The feature axis is then zero-padded
    from 338 to 384 for lane alignment.
    """
    eye_imgs = jnp.eye(HW, dtype=jnp.float32).reshape(HW, 1, H, W)
    w_big = lax.conv_general_dilated(
        eye_imgs, w_conv.astype(jnp.float32), window_strides=(1, 1), padding="VALID",
        dimension_numbers=("NCHW", "OIHW", "NCHW")).reshape(HW, F)           # [784, 338]
    bconv_row = jnp.repeat(b_conv.astype(jnp.float32), P).reshape(1, F)      # [1, 338]
    wlin_t = w_lin.astype(jnp.float32).T                                     # [338, 10]

    w_big_p = jnp.zeros((HW, FP), jnp.float32).at[:, :F].set(w_big)          # [784, 384]
    bconv_p = jnp.zeros((1, FP), jnp.float32).at[:, :F].set(bconv_row)       # [1, 384]
    wlin_p = jnp.zeros((FP, NOUT), jnp.float32).at[:F, :].set(wlin_t)        # [384, 10]
    blin_row = b_lin.astype(jnp.float32).reshape(1, NOUT)                    # [1, 10]
    return (w_big_p.astype(mxu_dtype), bconv_p, wlin_p.astype(mxu_dtype), blin_row)


@functools.partial(jax.jit, static_argnames=("batch_tile",))
def single_layer_cnn(x, params, *, batch_tile=256):
    """x: [B, 1, 28, 28] float32 (NCHW). params: prepare_params(...). Returns logits [B, 10]."""
    w_big, bconv_row, wlin_t, blin_row = params
    bsz = x.shape[0]
    # Only per-call glue: the (metadata-only) flatten; the dtype cast happens in-kernel.
    x_flat = x.reshape(bsz, HW)                                              # [B, 784] f32

    tb = bsz if bsz <= batch_tile else batch_tile      # whole batch per step for small B
    grid = (pl.cdiv(bsz, tb),)

    return pl.pallas_call(
        cnn_kernel,
        out_shape=jax.ShapeDtypeStruct((bsz, NOUT), jnp.float32),
        grid=grid,
        in_specs=[
            pl.BlockSpec((tb, HW), lambda b: (b, 0)),       # activations: tiled over batch
            pl.BlockSpec((HW, FP), lambda b: (0, 0)),       # conv-as-matmul weight (resident)
            pl.BlockSpec((1, FP), lambda b: (0, 0)),        # conv bias row (resident)
            pl.BlockSpec((FP, NOUT), lambda b: (0, 0)),     # linear weight (resident)
            pl.BlockSpec((1, NOUT), lambda b: (0, 0)),      # linear bias row (resident)
        ],
        out_specs=pl.BlockSpec((tb, NOUT), lambda b: (b, 0)),
        compiler_params=pltpu.CompilerParams(
            dimension_semantics=("parallel",)),             # v7x: both TCs split the batch
    )(x_flat, w_big, bconv_row, wlin_t, blin_row)


def reference(x, w_conv, b_conv, w_lin, b_lin):
    conv = lax.conv_general_dilated(
        x, w_conv, window_strides=(1, 1), padding="VALID",
        dimension_numbers=("NCHW", "OIHW", "NCHW"))
    conv = conv + b_conv[None, :, None, None]
    h = jnp.maximum(conv.reshape(x.shape[0], -1), 0.0)      # channel-major flatten, like torch
    return h @ w_lin.T + b_lin


if __name__ == "__main__":
    key = jax.random.PRNGKey(0)
    kx, kwc, kbc, kwl, kbl = jax.random.split(key, 5)

    x = jax.random.normal(kx, (B, 1, H, W), dtype=jnp.float32)
    w_conv = 0.05 * jax.random.normal(kwc, (OC, 1, KH, KW), dtype=jnp.float32)
    b_conv = 0.05 * jax.random.normal(kbc, (OC,), dtype=jnp.float32)
    w_lin = 0.05 * jax.random.normal(kwl, (NOUT, F), dtype=jnp.float32)
    b_lin = 0.05 * jax.random.normal(kbl, (NOUT,), dtype=jnp.float32)

    params = jax.block_until_ready(prepare_params(w_conv, b_conv, w_lin, b_lin))
    out = jax.block_until_ready(single_layer_cnn(x, params))

    ref = reference(x, w_conv, b_conv, w_lin, b_lin)
    # bf16 MXU operands + f32 accumulation -> small (~1e-3) differences vs the f32 reference.
    if not jnp.allclose(out, ref, atol=2e-2, rtol=2e-2):
        raise AssertionError(f"mismatch: max abs diff {jnp.max(jnp.abs(out - ref))}")

    print("KERNEL_OK")
</pallas_src>

<mosaic_0001>
module attributes {stable_mosaic.version = 11 : i64} {
  func.func @cnn_kernel(%arg0: i32, %arg1: memref<2x784xf32, #tpu.memory_space<vmem>>, %arg2: memref<784x384xbf16, #tpu.memory_space<vmem>>, %arg3: memref<1x384xf32, #tpu.memory_space<vmem>>, %arg4: memref<384x10xbf16, #tpu.memory_space<vmem>>, %arg5: memref<1x10xf32, #tpu.memory_space<vmem>>, %arg6: memref<2x10xf32, #tpu.memory_space<vmem>>) attributes {dimension_semantics = [#tpu.dimension_semantics<parallel>], iteration_bounds = array<i64: 1>, scalar_prefetch = 0 : i64, scratch_operands = 0 : i64, tpu.core_type = #tpu.core_type<tc>, window_params = [{transform_indices = @transform_0, window_bounds = array<i64: 2, 784>}, {pipeline_mode = #tpu.pipeline_mode<synchronous>, transform_indices = @transform_1, window_bounds = array<i64: 784, 384>}, {pipeline_mode = #tpu.pipeline_mode<synchronous>, transform_indices = @transform_2, window_bounds = array<i64: 1, 384>}, {pipeline_mode = #tpu.pipeline_mode<synchronous>, transform_indices = @transform_3, window_bounds = array<i64: 384, 10>}, {pipeline_mode = #tpu.pipeline_mode<synchronous>, transform_indices = @transform_4, window_bounds = array<i64: 1, 10>}, {transform_indices = @transform_5, window_bounds = array<i64: 2, 10>}]} {
    %c0 = arith.constant 0 : index
    %c0_0 = arith.constant 0 : index
    %0 = vector.load %arg1[%c0, %c0_0] : memref<2x784xf32, #tpu.memory_space<vmem>>, vector<2x784xf32>
    %1 = arith.truncf %0 : vector<2x784xf32> to vector<2x784xbf16>
    %c0_1 = arith.constant 0 : index
    %c0_2 = arith.constant 0 : index
    %2 = vector.load %arg2[%c0_1, %c0_2] : memref<784x384xbf16, #tpu.memory_space<vmem>>, vector<784x384xbf16>
    %cst = arith.constant dense<0.000000e+00> : vector<2x384xf32>
    %3 = tpu.matmul %1, %2, %cst {dimension_numbers = #tpu.dot_dimension_numbers<[1], [0], [0], [1], [0, 0, 1, 1], [], []>} : vector<2x784xbf16>, vector<784x384xbf16>, vector<2x384xf32> -> vector<2x384xf32>
    %c0_3 = arith.constant 0 : index
    %c0_4 = arith.constant 0 : index
    %4 = vector.load %arg3[%c0_3, %c0_4] : memref<1x384xf32, #tpu.memory_space<vmem>>, vector<1x384xf32>
    %5 = vector.broadcast %4 : vector<1x384xf32> to vector<2x384xf32>
    %6 = arith.addf %3, %5 : vector<2x384xf32>
    %cst_5 = arith.constant 0.000000e+00 : f32
    %7 = vector.broadcast %cst_5 : f32 to vector<2x384xf32>
    %8 = arith.maximumf %6, %7 : vector<2x384xf32>
    %9 = arith.truncf %8 : vector<2x384xf32> to vector<2x384xbf16>
    %c0_6 = arith.constant 0 : index
    %c0_7 = arith.constant 0 : index
    %10 = vector.load %arg4[%c0_6, %c0_7] : memref<384x10xbf16, #tpu.memory_space<vmem>>, vector<384x10xbf16>
    %cst_8 = arith.constant dense<0.000000e+00> : vector<2x10xf32>
    %11 = tpu.matmul %9, %10, %cst_8 {dimension_numbers = #tpu.dot_dimension_numbers<[1], [0], [0], [1], [0, 0, 1, 1], [], []>} : vector<2x384xbf16>, vector<384x10xbf16>, vector<2x10xf32> -> vector<2x10xf32>
    %c0_9 = arith.constant 0 : index
    %c0_10 = arith.constant 0 : index
    %12 = vector.load %arg5[%c0_9, %c0_10] : memref<1x10xf32, #tpu.memory_space<vmem>>, vector<1x10xf32>
    %13 = vector.broadcast %12 : vector<1x10xf32> to vector<2x10xf32>
    %14 = arith.addf %11, %13 : vector<2x10xf32>
    %c0_11 = arith.constant 0 : index
    %c0_12 = arith.constant 0 : index
    %15 = vector.load %arg6[%c0_11, %c0_12] : memref<2x10xf32, #tpu.memory_space<vmem>>, vector<2x10xf32>
    tpu.vector_store %arg6[%c0_11, %c0_12], %14 {strides = array<i32>} : memref<2x10xf32, #tpu.memory_space<vmem>>, vector<2x10xf32>,
    return
  }
  func.func @transform_0(%arg0: i32) -> (i32, i32) {
    %c0_i32 = arith.constant 0 : i32
    %c0_i32_0 = arith.constant 0 : i32
    return %arg0, %c0_i32 : i32, i32
  }
  func.func @transform_1(%arg0: i32) -> (i32, i32) {
    %c0_i32 = arith.constant 0 : i32
    %c0_i32_0 = arith.constant 0 : i32
    %c0_i32_1 = arith.constant 0 : i32
    return %c0_i32, %c0_i32_0 : i32, i32
  }
  func.func @transform_2(%arg0: i32) -> (i32, i32) {
    %c0_i32 = arith.constant 0 : i32
    %c0_i32_0 = arith.constant 0 : i32
    %c0_i32_1 = arith.constant 0 : i32
    return %c0_i32, %c0_i32_0 : i32, i32
  }
  func.func @transform_3(%arg0: i32) -> (i32, i32) {
    %c0_i32 = arith.constant 0 : i32
    %c0_i32_0 = arith.constant 0 : i32
    %c0_i32_1 = arith.constant 0 : i32
    return %c0_i32, %c0_i32_0 : i32, i32
  }
  func.func @transform_4(%arg0: i32) -> (i32, i32) {
    %c0_i32 = arith.constant 0 : i32
    %c0_i32_0 = arith.constant 0 : i32
    %c0_i32_1 = arith.constant 0 : i32
    return %c0_i32, %c0_i32_0 : i32, i32
  }
  func.func @transform_5(%arg0: i32) -> (i32, i32) {
    %c0_i32 = arith.constant 0 : i32
    %c0_i32_0 = arith.constant 0 : i32
    return %arg0, %c0_i32 : i32, i32
  }
}

</mosaic_0001>

<llo_original>
// kernel: single_layer_cnn.1
$region0: #{single_layer_cnn.1}
  #allocation0 [shape = 'u32[]', space=smem, size = 0x4, offset = 0x4, fixed_abs, tag = 'smem constant byte address 0x4 - core index']
  #allocation1 [shape = 'u32[144,128]{1,0:T(1,128)}', space=vmem, size = 0x12000, scoped, tag = 'internal scratch']
  %s0 = inlined_call_operand.vmem [shape: f32[2,784], index: 0, kind: input, shape index: {}]
  %s1 = inlined_call_operand.hbm [shape: bf16[784,384], index: 1, kind: input, shape index: {}]
  %s2 = inlined_call_operand.vmem [shape: f32[1,384], index: 2, kind: input, shape index: {}]
  %s3 = inlined_call_operand.vmem [shape: bf16[384,10], index: 3, kind: input, shape index: {}]
  %s4 = inlined_call_operand.vmem [shape: f32[1,10], index: 4, kind: input, shape index: {}]
  %s5 = inlined_call_operand.hbm [shape: f32[2,10], index: 5, kind: output, shape index: {}]
  %s6 = sld [smem:[#allocation0]]
  $region34: #{single_layer_cnn.1} parent=0
    _
  %s8 = ssub.s32 1, %s6
  %s9 = scalar_select 0, %s8, %s6
  $region1: #{single_layer_cnn.1} parent=0
    #allocation2 [shape = 'u8[602112]{0}', space=vmem, size = 0x93000, scoped, tag = 'input window, operand 1, single buffered']
    #allocation3 [shape = 's32[1]{0}', space=sflag, size = 0x4, scoped, tag = 'scoped memory for single_layer_cnn.1']
    #allocation4 [shape = 's32[1]{0}', space=sflag, size = 0x4, scoped, tag = 'scoped memory for single_layer_cnn.1']
    #allocation5 [shape = 'u8[1024]{0}', space=vmem, size = 0x400, scoped, tag = 'output window, operand 0, single buffered']
    %10 = vsyncpa [#allocation3], 0
    %11 = vsyncpa [#allocation4], 0
    // Predicated region
    $region2: #{single_layer_cnn.1} parent=1 // pred_check
      _
    $region3: #{single_layer_cnn.1} parent=1 // pred_check_branch
      %13 = sbr.rel (0) target = $region5
    $region4: #{single_layer_cnn.1} parent=1 // pred_region
      _
    $region5: #{single_layer_cnn.1} parent=1 // pred_fallthru
      _
    // Predicated region
    $region6: #{single_layer_cnn.1} parent=1 // pred_check
      _
    $region7: #{single_layer_cnn.1} parent=1 // pred_check_branch
      %15 = sbr.rel (0) target = $region9
    $region8: #{single_layer_cnn.1} parent=1 // pred_region
      %s17 = ssub.s32 18816, 18816
      %18 = vsyncadd [#allocation3], %s17
      %s19 = sshll.u32 [#allocation2], 4
      %s20 = int_to_ptr.vmem [resolvable:$true] %s19
      %25 = dma.hbm_to_vmem [thread:$0]  %s1, 18816, %s20, [#allocation3], 192, 192, 12
    $region9: #{single_layer_cnn.1} parent=1 // pred_fallthru
      _
    // Predicated region
    $region10: #{single_layer_cnn.1} parent=1 // pred_check
      _
    $region11: #{single_layer_cnn.1} parent=1 // pred_check_branch
      %27 = sbr.rel (0) target = $region13
    $region12: #{single_layer_cnn.1} parent=1 // pred_region
      _
    $region13: #{single_layer_cnn.1} parent=1 // pred_fallthru
      _
    // Predicated region
    $region14: #{single_layer_cnn.1} parent=1 // pred_check
      _
    $region15: #{single_layer_cnn.1} parent=1 // pred_check_branch
      %29 = sbr.rel (0) target = $region17
    $region16: #{single_layer_cnn.1} parent=1 // pred_region
      _
    $region17: #{single_layer_cnn.1} parent=1 // pred_fallthru
      _
    // Predicated region
    $region18: #{single_layer_cnn.1} parent=1 // pred_check
      _
    $region19: #{single_layer_cnn.1} parent=1 // pred_check_branch
      %31 = sbr.rel (0) target = $region21
    $region20: #{single_layer_cnn.1} parent=1 // pred_region
      _
    $region21: #{single_layer_cnn.1} parent=1 // pred_fallthru
      _
    // Predicated region
    $region22: #{single_layer_cnn.1} parent=1 // pred_check
      _
    $region23: #{single_layer_cnn.1} parent=1 // pred_check_branch
      %33 = sbr.rel (0) target = $region25
    $region24: #{single_layer_cnn.1} parent=1 // pred_region
      %34 = dma.done [#allocation3], 18816
    $region25: #{single_layer_cnn.1} parent=1 // pred_fallthru
      _
    %v36 = vld [vmem:[%s0] sm:$0xff]
    %v37 = vld [vmem:[%s0 + $0x8] sm:$0x3f]
    %v40 = vcombine.high %v36, %v36
    %v42 = vunpack.c.l.s4 1983009808
    %v43 = vunpack.c.0.s8 %v42
    %v44 = vlaneseq
    %v45 = vshrl.u32 %v44, 7
    %v46 = vsub.s32 %v43, %v45
    %v47 = vrot.slane %v36, %v46
    %v49 = vunpack.c.l.s4 1983009808
    %v50 = vunpack.c.0.s8 %v49
    %v51 = vlaneseq
    %v52 = vshrl.u32 %v51, 7
    %v53 = vsub.s32 %v50, %v52
    %v54 = vrot.slane %v40, %v53
    %v55 = vcombine.high %v47, %v47
    %v56 = vcombine.high %v54, %v54
    %v57 = vcombine.high %v37, %v37
    %v59 = vunpack.c.l.s4 1983009808
    %v60 = vunpack.c.0.s8 %v59
    %v61 = vlaneseq
    %v62 = vshrl.u32 %v61, 7
    %v63 = vsub.s32 %v60, %v62
    %v64 = vrot.slane %v37, %v63
    %v66 = vunpack.c.l.s4 1983009808
    %v67 = vunpack.c.0.s8 %v66
    %v68 = vlaneseq
    %v69 = vshrl.u32 %v68, 7
    %v70 = vsub.s32 %v67, %v69
    %v71 = vrot.slane %v57, %v70
    %v72 = vcombine.high %v64, %v64
    %v80 = vpack.c.bf16 %v47, %v47
    %v81 = vpack.c.bf16 %v55, %v55
    %v82 = vpack.c.bf16 %v54, %v54
    %v83 = vpack.c.bf16 %v56, %v56
    %v84 = vpack.c.bf16 %v64, %v64
    %v85 = vpack.c.bf16 %v72, %v72
    %v86 = vpack.c.bf16 %v71, %v71
    %v87 = vld [vmem:[#allocation2] sm:$0xff]
    %v88 = vld [vmem:[#allocation2 + $0x8] sm:$0xf]
    %v89 = vld [vmem:[#allocation2 + $0xc] sm:$0xff]
    %v90 = vld [vmem:[#allocation2 + $0x14] sm:$0xf]
    %v91 = vld [vmem:[#allocation2 + $0x18] sm:$0xff]
    %v92 = vld [vmem:[#allocation2 + $0x20] sm:$0xf]
    %v93 = vld [vmem:[#allocation2 + $0x24] sm:$0xff]
    %v94 = vld [vmem:[#allocation2 + $0x2c] sm:$0xf]
    %v95 = vld [vmem:[#allocation2 + $0x30] sm:$0xff]
    %v96 = vld [vmem:[#allocation2 + $0x38] sm:$0xf]
    %v97 = vld [vmem:[#allocation2 + $0x3c] sm:$0xff]
    %v98 = vld [vmem:[#allocation2 + $0x44] sm:$0xf]
    %v99 = vld [vmem:[#allocation2 + $0x48] sm:$0xff]
    %v100 = vld [vmem:[#allocation2 + $0x50] sm:$0xf]
    %v101 = vld [vmem:[#allocation2 + $0x54] sm:$0xff]
    %v102 = vld [vmem:[#allocation2 + $0x5c] sm:$0xf]
    %v103 = vld [vmem:[#allocation2 + $0x60] sm:$0xff]
    %v104 = vld [vmem:[#allocation2 + $0x68] sm:$0xf]
    %v105 = vld [vmem:[#allocation2 + $0x6c] sm:$0xff]
    %v106 = vld [vmem:[#allocation2 + $0x74] sm:$0xf]
    %v107 = vld [vmem:[#allocation2 + $0x78] sm:$0xff]
    %v108 = vld [vmem:[#allocation2 + $0x80] sm:$0xf]
    %v109 = vld [vmem:[#allocation2 + $0x84] sm:$0xff]
    %v110 = vld [vmem:[#allocation2 + $0x8c] sm:$0xf]
    %v111 = vld [vmem:[#allocation2 + $0x90] sm:$0xff]
    %v112 = vld [vmem:[#allocation2 + $0x98] sm:$0xf]
    %v113 = vld [vmem:[#allocation2 + $0x9c] sm:$0xff]
    %v114 = vld [vmem:[#allocation2 + $0xa4] sm:$0xf]
    %v115 = vld [vmem:[#allocation2 + $0xa8] sm:$0xff]
    %v116 = vld [vmem:[#allocation2 + $0xb0] sm:$0xf]
    %v117 = vld [vmem:[#allocation2 + $0xb4] sm:$0xff]
    %v118 = vld [vmem:[#allocation2 + $0xbc] sm:$0xf]
    %v119 = vld [vmem:[#allocation2 + $0xc0] sm:$0xff]
    %v120 = vld [vmem:[#allocation2 + $0xc8] sm:$0xf]
    %v121 = vld [vmem:[#allocation2 + $0xcc] sm:$0xff]
    %v122 = vld [vmem:[#allocation2 + $0xd4] sm:$0xf]
    %v123 = vld [vmem:[#allocation2 + $0xd8] sm:$0xff]
    %v124 = vld [vmem:[#allocation2 + $0xe0] sm:$0xf]
    %v125 = vld [vmem:[#allocation2 + $0xe4] sm:$0xff]
    %v126 = vld [vmem:[#allocation2 + $0xec] sm:$0xf]
    %v127 = vld [vmem:[#allocation2 + $0xf0] sm:$0xff]
    %v128 = vld [vmem:[#allocation2 + $0xf8] sm:$0xf]
    %v129 = vld [vmem:[#allocation2 + $0xfc] sm:$0xff]
    %v130 = vld [vmem:[#allocation2 + $0x104] sm:$0xf]
    %v131 = vld [vmem:[#allocation2 + $0x108] sm:$0xff]
    %v132 = vld [vmem:[#allocation2 + $0x110] sm:$0xf]
    %v133 = vld [vmem:[#allocation2 + $0x114] sm:$0xff]
    %v134 = vld [vmem:[#allocation2 + $0x11c] sm:$0xf]
    %v135 = vld [vmem:[#allocation2 + $0x120] sm:$0xff]
    %v136 = vld [vmem:[#allocation2 + $0x128] sm:$0xf]
    %v137 = vld [vmem:[#allocation2 + $0x12c] sm:$0xff]
    %v138 = vld [vmem:[#allocation2 + $0x134] sm:$0xf]
    %v139 = vld [vmem:[#allocation2 + $0x138] sm:$0xff]
    %v140 = vld [vmem:[#allocation2 + $0x140] sm:$0xf]
    %v141 = vld [vmem:[#allocation2 + $0x144] sm:$0xff]
    %v142 = vld [vmem:[#allocation2 + $0x14c] sm:$0xf]
    %v143 = vld [vmem:[#allocation2 + $0x150] sm:$0xff]
    %v144 = vld [vmem:[#allocation2 + $0x158] sm:$0xf]
    %v145 = vld [vmem:[#allocation2 + $0x15c] sm:$0xff]
    %v146 = vld [vmem:[#allocation2 + $0x164] sm:$0xf]
    %v147 = vld [vmem:[#allocation2 + $0x168] sm:$0xff]
    %v148 = vld [vmem:[#allocation2 + $0x170] sm:$0xf]
    %v149 = vld [vmem:[#allocation2 + $0x174] sm:$0xff]
    %v150 = vld [vmem:[#allocation2 + $0x17c] sm:$0xf]
    %v151 = vld [vmem:[#allocation2 + $0x180] sm:$0xff]
    %v152 = vld [vmem:[#allocation2 + $0x188] sm:$0xf]
    %v153 = vld [vmem:[#allocation2 + $0x18c] sm:$0xff]
    %v154 = vld [vmem:[#allocation2 + $0x194] sm:$0xf]
    %v155 = vld [vmem:[#allocation2 + $0x198] sm:$0xff]
    %v156 = vld [vmem:[#allocation2 + $0x1a0] sm:$0xf]
    %v157 = vld [vmem:[#allocation2 + $0x1a4] sm:$0xff]
    %v158 = vld [vmem:[#allocation2 + $0x1ac] sm:$0xf]
    %v159 = vld [vmem:[#allocation2 + $0x1b0] sm:$0xff]
    %v160 = vld [vmem:[#allocation2 + $0x1b8] sm:$0xf]
    %v161 = vld [vmem:[#allocation2 + $0x1bc] sm:$0xff]
    %v162 = vld [vmem:[#allocation2 + $0x1c4] sm:$0xf]
    %v163 = vld [vmem:[#allocation2 + $0x1c8] sm:$0xff]
    %v164 = vld [vmem:[#allocation2 + $0x1d0] sm:$0xf]
    %v165 = vld [vmem:[#allocation2 + $0x1d4] sm:$0xff]
    %v166 = vld [vmem:[#allocation2 + $0x1dc] sm:$0xf]
    %v167 = vld [vmem:[#allocation2 + $0x1e0] sm:$0xff]
    %v168 = vld [vmem:[#allocation2 + $0x1e8] sm:$0xf]
    %v169 = vld [vmem:[#allocation2 + $0x1ec] sm:$0xff]
    %v170 = vld [vmem:[#allocation2 + $0x1f4] sm:$0xf]
    %v171 = vld [vmem:[#allocation2 + $0x1f8] sm:$0xff]
    %v172 = vld [vmem:[#allocation2 + $0x200] sm:$0xf]
    %v173 = vld [vmem:[#allocation2 + $0x204] sm:$0xff]
    %v174 = vld [vmem:[#allocation2 + $0x20c] sm:$0xf]
    %v175 = vld [vmem:[#allocation2 + $0x210] sm:$0xff]
    %v176 = vld [vmem:[#allocation2 + $0x218] sm:$0xf]
    %v177 = vld [vmem:[#allocation2 + $0x21c] sm:$0xff]
    %v178 = vld [vmem:[#allocation2 + $0x224] sm:$0xf]
    %v179 = vld [vmem:[#allocation2 + $0x228] sm:$0xff]
    %v180 = vld [vmem:[#allocation2 + $0x230] sm:$0xf]
    %v181 = vld [vmem:[#allocation2 + $0x234] sm:$0xff]
    %v182 = vld [vmem:[#allocation2 + $0x23c] sm:$0xf]
    %v183 = vld [vmem:[#allocation2 + $0x240] sm:$0xff]
    %v184 = vld [vmem:[#allocation2 + $0x248] sm:$0xf]
    %v185 = vld [vmem:[#allocation2 + $0x24c] sm:$0xff]
    %v186 = vld [vmem:[#allocation2 + $0x254] sm:$0xf]
    %v187 = vld [vmem:[#allocation2 + $0x258] sm:$0xff]
    %v188 = vld [vmem:[#allocation2 + $0x260] sm:$0xf]
    %v189 = vld [vmem:[#allocation2 + $0x264] sm:$0xff]
    %v190 = vld [vmem:[#allocation2 + $0x26c] sm:$0xf]
    %v191 = vld [vmem:[#allocation2 + $0x270] sm:$0xff]
    %v192 = vld [vmem:[#allocation2 + $0x278] sm:$0xf]
    %v193 = vld [vmem:[#allocation2 + $0x27c] sm:$0xff]
    %v194 = vld [vmem:[#allocation2 + $0x284] sm:$0xf]
    %v195 = vld [vmem:[#allocation2 + $0x288] sm:$0xff]
    %v196 = vld [vmem:[#allocation2 + $0x290] sm:$0xf]
    %v197 = vld [vmem:[#allocation2 + $0x294] sm:$0xff]
    %v198 = vld [vmem:[#allocation2 + $0x29c] sm:$0xf]
    %v199 = vld [vmem:[#allocation2 + $0x2a0] sm:$0xff]
    %v200 = vld [vmem:[#allocation2 + $0x2a8] sm:$0xf]
    %v201 = vld [vmem:[#allocation2 + $0x2ac] sm:$0xff]
    %v202 = vld [vmem:[#allocation2 + $0x2b4] sm:$0xf]
    %v203 = vld [vmem:[#allocation2 + $0x2b8] sm:$0xff]
    %v204 = vld [vmem:[#allocation2 + $0x2c0] sm:$0xf]
    %v205 = vld [vmem:[#allocation2 + $0x2c4] sm:$0xff]
    %v206 = vld [vmem:[#allocation2 + $0x2cc] sm:$0xf]
    %v207 = vld [vmem:[#allocation2 + $0x2d0] sm:$0xff]
    %v208 = vld [vmem:[#allocation2 + $0x2d8] sm:$0xf]
    %v209 = vld [vmem:[#allocation2 + $0x2dc] sm:$0xff]
    %v210 = vld [vmem:[#allocation2 + $0x2e4] sm:$0xf]
    %v211 = vld [vmem:[#allocation2 + $0x2e8] sm:$0xff]
    %v212 = vld [vmem:[#allocation2 + $0x2f0] sm:$0xf]
    %v213 = vld [vmem:[#allocation2 + $0x2f4] sm:$0xff]
    %v214 = vld [vmem:[#allocation2 + $0x2fc] sm:$0xf]
    %v215 = vld [vmem:[#allocation2 + $0x300] sm:$0xff]
    %v216 = vld [vmem:[#allocation2 + $0x308] sm:$0xf]
    %v217 = vld [vmem:[#allocation2 + $0x30c] sm:$0xff]
    %v218 = vld [vmem:[#allocation2 + $0x314] sm:$0xf]
    %v219 = vld [vmem:[#allocation2 + $0x318] sm:$0xff]
    %v220 = vld [vmem:[#allocation2 + $0x320] sm:$0xf]
    %v221 = vld [vmem:[#allocation2 + $0x324] sm:$0xff]
    %v222 = vld [vmem:[#allocation2 + $0x32c] sm:$0xf]
    %v223 = vld [vmem:[#allocation2 + $0x330] sm:$0xff]
    %v224 = vld [vmem:[#allocation2 + $0x338] sm:$0xf]
    %v225 = vld [vmem:[#allocation2 + $0x33c] sm:$0xff]
    %v226 = vld [vmem:[#allocation2 + $0x344] sm:$0xf]
    %v227 = vld [vmem:[#allocation2 + $0x348] sm:$0xff]
    %v228 = vld [vmem:[#allocation2 + $0x350] sm:$0xf]
    %v229 = vld [vmem:[#allocation2 + $0x354] sm:$0xff]
    %v230 = vld [vmem:[#allocation2 + $0x35c] sm:$0xf]
    %v231 = vld [vmem:[#allocation2 + $0x360] sm:$0xff]
    %v232 = vld [vmem:[#allocation2 + $0x368] sm:$0xf]
    %v233 = vld [vmem:[#allocation2 + $0x36c] sm:$0xff]
    %v234 = vld [vmem:[#allocation2 + $0x374] sm:$0xf]
    %v235 = vld [vmem:[#allocation2 + $0x378] sm:$0xff]
    %v236 = vld [vmem:[#allocation2 + $0x380] sm:$0xf]
    %v237 = vld [vmem:[#allocation2 + $0x384] sm:$0xff]
    %v238 = vld [vmem:[#allocation2 + $0x38c] sm:$0xf]
    %v239 = vld [vmem:[#allocation2 + $0x390] sm:$0xff]
    %v240 = vld [vmem:[#allocation2 + $0x398] sm:$0xf]
    %v241 = vld [vmem:[#allocation2 + $0x39c] sm:$0xff]
    %v242 = vld [vmem:[#allocation2 + $0x3a4] sm:$0xf]
    %v243 = vld [vmem:[#allocation2 + $0x3a8] sm:$0xff]
    %v244 = vld [vmem:[#allocation2 + $0x3b0] sm:$0xf]
    %v245 = vld [vmem:[#allocation2 + $0x3b4] sm:$0xff]
    %v246 = vld [vmem:[#allocation2 + $0x3bc] sm:$0xf]
    %v247 = vld [vmem:[#allocation2 + $0x3c0] sm:$0xff]
    %v248 = vld [vmem:[#allocation2 + $0x3c8] sm:$0xf]
    %v249 = vld [vmem:[#allocation2 + $0x3cc] sm:$0xff]
    %v250 = vld [vmem:[#allocation2 + $0x3d4] sm:$0xf]
    %v251 = vld [vmem:[#allocation2 + $0x3d8] sm:$0xff]
    %v252 = vld [vmem:[#allocation2 + $0x3e0] sm:$0xf]
    %v253 = vld [vmem:[#allocation2 + $0x3e4] sm:$0xff]
    %v254 = vld [vmem:[#allocation2 + $0x3ec] sm:$0xf]
    %v255 = vld [vmem:[#allocation2 + $0x3f0] sm:$0xff]
    %v256 = vld [vmem:[#allocation2 + $0x3f8] sm:$0xf]
    %v257 = vld [vmem:[#allocation2 + $0x3fc] sm:$0xff]
    %v258 = vld [vmem:[#allocation2 + $0x404] sm:$0xf]
    %v259 = vld [vmem:[#allocation2 + $0x408] sm:$0xff]
    %v260 = vld [vmem:[#allocation2 + $0x410] sm:$0xf]
    %v261 = vld [vmem:[#allocation2 + $0x414] sm:$0xff]
    %v262 = vld [vmem:[#allocation2 + $0x41c] sm:$0xf]
    %v263 = vld [vmem:[#allocation2 + $0x420] sm:$0xff]
    %v264 = vld [vmem:[#allocation2 + $0x428] sm:$0xf]
    %v265 = vld [vmem:[#allocation2 + $0x42c] sm:$0xff]
    %v266 = vld [vmem:[#allocation2 + $0x434] sm:$0xf]
    %v267 = vld [vmem:[#allocation2 + $0x438] sm:$0xff]
    %v268 = vld [vmem:[#allocation2 + $0x440] sm:$0xf]
    %v269 = vld [vmem:[#allocation2 + $0x444] sm:$0xff]
    %v270 = vld [vmem:[#allocation2 + $0x44c] sm:$0xf]
    %v271 = vld [vmem:[#allocation2 + $0x450] sm:$0xff]
    %v272 = vld [vmem:[#allocation2 + $0x458] sm:$0xf]
    %v273 = vld [vmem:[#allocation2 + $0x45c] sm:$0xff]
    %v274 = vld [vmem:[#allocation2 + $0x464] sm:$0xf]
    %v275 = vld [vmem:[#allocation2 + $0x468] sm:$0xff]
    %v276 = vld [vmem:[#allocation2 + $0x470] sm:$0xf]
    %v277 = vld [vmem:[#allocation2 + $0x474] sm:$0xff]
    %v278 = vld [vmem:[#allocation2 + $0x47c] sm:$0xf]
    %v279 = vld [vmem:[#allocation2 + $0x480] sm:$0xff]
    %v280 = vld [vmem:[#allocation2 + $0x488] sm:$0xf]
    %v281 = vld [vmem:[#allocation2 + $0x48c] sm:$0xff]
    %v282 = vld [vmem:[#allocation2 + $0x494] sm:$0xf]
    %v283 = vld [vmem:[%s2] sm:$0x7]
    %v285 = vlaneseq
    %v286 = vshrl.u32 %v285, 7
    %v287 = vsub.s32 0, %v286
    %v288 = vrot.slane %v283, %v287
    %v289 = vlaneseq
    %v290 = vshrl.u32 %v289, 7
    %v291 = vsub.s32 1, %v290
    %v292 = vrot.slane %v283, %v291
    %v293 = vlaneseq
    %v294 = vshrl.u32 %v293, 7
    %v295 = vsub.s32 2, %v294
    %v296 = vrot.slane %v283, %v295
    %v496 = vunpack.c.l.b16 %v87
    %v497 = vunpack.c.h.b16 %v87
    %v498 = vunpack.c.l.b16 %v88
    %v499 = vunpack.c.l.b16 %v89
    %v500 = vunpack.c.h.b16 %v89
    %v501 = vunpack.c.l.b16 %v90
    %v502 = vunpack.c.l.b16 %v91
    %v503 = vunpack.c.h.b16 %v91
    %v504 = vunpack.c.l.b16 %v92
    %v505 = vunpack.c.l.b16 %v93
    %v506 = vunpack.c.h.b16 %v93
    %v507 = vunpack.c.l.b16 %v94
    %v508 = vunpack.c.l.b16 %v95
    %v509 = vunpack.c.h.b16 %v95
    %v510 = vunpack.c.l.b16 %v96
    %v511 = vunpack.c.l.b16 %v97
    %v512 = vunpack.c.h.b16 %v97
    %v513 = vunpack.c.l.b16 %v98
    %v514 = vunpack.c.l.b16 %v99
    %v515 = vunpack.c.h.b16 %v99
    %v516 = vunpack.c.l.b16 %v100
    %v517 = vunpack.c.l.b16 %v101
    %v518 = vunpack.c.h.b16 %v101
    %v519 = vunpack.c.l.b16 %v102
    %v520 = vunpack.c.l.b16 %v103
    %v521 = vunpack.c.h.b16 %v103
    %v522 = vunpack.c.l.b16 %v104
    %v523 = vunpack.c.l.b16 %v105
    %v524 = vunpack.c.h.b16 %v105
    %v525 = vunpack.c.l.b16 %v106
    %v526 = vunpack.c.l.b16 %v107
    %v527 = vunpack.c.h.b16 %v107
    %v528 = vunpack.c.l.b16 %v108
    %v529 = vunpack.c.l.b16 %v109
    %v530 = vunpack.c.h.b16 %v109
    %v531 = vunpack.c.l.b16 %v110
    %v532 = vunpack.c.l.b16 %v111
    %v533 = vunpack.c.h.b16 %v111
    %v534 = vunpack.c.l.b16 %v112
    %v535 = vunpack.c.l.b16 %v113
    %v536 = vunpack.c.h.b16 %v113
    %v537 = vunpack.c.l.b16 %v114
    %v538 = vunpack.c.l.b16 %v115
    %v539 = vunpack.c.h.b16 %v115
    %v540 = vunpack.c.l.b16 %v116
    %v541 = vunpack.c.l.b16 %v117
    %v542 = vunpack.c.h.b16 %v117
    %v543 = vunpack.c.l.b16 %v118
    %v544 = vunpack.c.l.b16 %v119
    %v545 = vunpack.c.h.b16 %v119
    %v546 = vunpack.c.l.b16 %v120
    %v547 = vunpack.c.l.b16 %v121
    %v548 = vunpack.c.h.b16 %v121
    %v549 = vunpack.c.l.b16 %v122
    %v550 = vunpack.c.l.b16 %v123
    %v551 = vunpack.c.h.b16 %v123
    %v552 = vunpack.c.l.b16 %v124
    %v553 = vunpack.c.l.b16 %v125
    %v554 = vunpack.c.h.b16 %v125
    %v555 = vunpack.c.l.b16 %v126
    %v556 = vunpack.c.l.b16 %v127
    %v557 = vunpack.c.h.b16 %v127
    %v558 = vunpack.c.l.b16 %v128
    %v559 = vunpack.c.l.b16 %v129
    %v560 = vunpack.c.h.b16 %v129
    %v561 = vunpack.c.l.b16 %v130
    %v562 = vunpack.c.l.b16 %v131
    %v563 = vunpack.c.h.b16 %v131
    %v564 = vunpack.c.l.b16 %v132
    %v565 = vunpack.c.l.b16 %v133
    %v566 = vunpack.c.h.b16 %v133
    %v567 = vunpack.c.l.b16 %v134
    %v568 = vunpack.c.l.b16 %v135
    %v569 = vunpack.c.h.b16 %v135
    %v570 = vunpack.c.l.b16 %v136
    %v571 = vunpack.c.l.b16 %v137
    %v572 = vunpack.c.h.b16 %v137
    %v573 = vunpack.c.l.b16 %v138
    %v574 = vunpack.c.l.b16 %v139
    %v575 = vunpack.c.h.b16 %v139
    %v576 = vunpack.c.l.b16 %v140
    %v577 = vunpack.c.l.b16 %v141
    %v578 = vunpack.c.h.b16 %v141
    %v579 = vunpack.c.l.b16 %v142
    %v580 = vunpack.c.l.b16 %v143
    %v581 = vunpack.c.h.b16 %v143
    %v582 = vunpack.c.l.b16 %v144
    %v583 = vunpack.c.l.b16 %v145
    %v584 = vunpack.c.h.b16 %v145
    %v585 = vunpack.c.l.b16 %v146
    %v586 = vunpack.c.l.b16 %v147
    %v587 = vunpack.c.h.b16 %v147
    %v588 = vunpack.c.l.b16 %v148
    %v589 = vunpack.c.l.b16 %v149
    %v590 = vunpack.c.h.b16 %v149
    %v591 = vunpack.c.l.b16 %v150
    %v592 = vunpack.c.l.b16 %v151
    %v593 = vunpack.c.h.b16 %v151
    %v594 = vunpack.c.l.b16 %v152
    %v595 = vunpack.c.l.b16 %v153
    %v596 = vunpack.c.h.b16 %v153
    %v597 = vunpack.c.l.b16 %v154
    %v598 = vunpack.c.l.b16 %v155
    %v599 = vunpack.c.h.b16 %v155
    %v600 = vunpack.c.l.b16 %v156
    %v601 = vunpack.c.l.b16 %v157
    %v602 = vunpack.c.h.b16 %v157
    %v603 = vunpack.c.l.b16 %v158
    %v604 = vunpack.c.l.b16 %v159
    %v605 = vunpack.c.h.b16 %v159
    %v606 = vunpack.c.l.b16 %v160
    %v607 = vunpack.c.l.b16 %v161
    %v608 = vunpack.c.h.b16 %v161
    %v609 = vunpack.c.l.b16 %v162
    %v610 = vunpack.c.l.b16 %v163
    %v611 = vunpack.c.h.b16 %v163
    %v612 = vunpack.c.l.b16 %v164
    %v613 = vunpack.c.l.b16 %v165
    %v614 = vunpack.c.h.b16 %v165
    %v615 = vunpack.c.l.b16 %v166
    %v616 = vunpack.c.l.b16 %v167
    %v617 = vunpack.c.h.b16 %v167
    %v618 = vunpack.c.l.b16 %v168
    %v619 = vunpack.c.l.b16 %v169
    %v620 = vunpack.c.h.b16 %v169
    %v621 = vunpack.c.l.b16 %v170
    %v622 = vunpack.c.l.b16 %v171
    %v623 = vunpack.c.h.b16 %v171
    %v624 = vunpack.c.l.b16 %v172
    %v625 = vunpack.c.l.b16 %v173
    %v626 = vunpack.c.h.b16 %v173
    %v627 = vunpack.c.l.b16 %v174
    %v628 = vunpack.c.l.b16 %v175
    %v629 = vunpack.c.h.b16 %v175
    %v630 = vunpack.c.l.b16 %v176
    %v631 = vunpack.c.l.b16 %v177
    %v632 = vunpack.c.h.b16 %v177
    %v633 = vunpack.c.l.b16 %v178
    %v634 = vunpack.c.l.b16 %v179
    %v635 = vunpack.c.h.b16 %v179
    %v636 = vunpack.c.l.b16 %v180
    %v637 = vunpack.c.l.b16 %v181
    %v638 = vunpack.c.h.b16 %v181
    %v639 = vunpack.c.l.b16 %v182
    %v640 = vunpack.c.l.b16 %v183
    %v641 = vunpack.c.h.b16 %v183
    %v642 = vunpack.c.l.b16 %v184
    %v643 = vunpack.c.l.b16 %v185
    %v644 = vunpack.c.h.b16 %v185
    %v645 = vunpack.c.l.b16 %v186
    %v646 = vunpack.c.l.b16 %v187
    %v647 = vunpack.c.h.b16 %v187
    %v648 = vunpack.c.l.b16 %v188
    %v649 = vunpack.c.l.b16 %v189
    %v650 = vunpack.c.h.b16 %v189
    %v651 = vunpack.c.l.b16 %v190
    %v652 = vunpack.c.l.b16 %v191
    %v653 = vunpack.c.h.b16 %v191
    %v654 = vunpack.c.l.b16 %v192
    %v655 = vunpack.c.l.b16 %v193
    %v656 = vunpack.c.h.b16 %v193
    %v657 = vunpack.c.l.b16 %v194
    %v658 = vunpack.c.l.b16 %v195
    %v659 = vunpack.c.h.b16 %v195
    %v660 = vunpack.c.l.b16 %v196
    %v661 = vunpack.c.l.b16 %v197
    %v662 = vunpack.c.h.b16 %v197
    %v663 = vunpack.c.l.b16 %v198
    %v664 = vunpack.c.l.b16 %v199
    %v665 = vunpack.c.h.b16 %v199
    %v666 = vunpack.c.l.b16 %v200
    %v667 = vunpack.c.l.b16 %v201
    %v668 = vunpack.c.h.b16 %v201
    %v669 = vunpack.c.l.b16 %v202
    %v670 = vunpack.c.l.b16 %v203
    %v671 = vunpack.c.h.b16 %v203
    %v672 = vunpack.c.l.b16 %v204
    %v673 = vunpack.c.l.b16 %v205
    %v674 = vunpack.c.h.b16 %v205
    %v675 = vunpack.c.l.b16 %v206
    %v676 = vunpack.c.l.b16 %v207
    %v677 = vunpack.c.h.b16 %v207
    %v678 = vunpack.c.l.b16 %v208
    %v679 = vunpack.c.l.b16 %v209
    %v680 = vunpack.c.h.b16 %v209
    %v681 = vunpack.c.l.b16 %v210
    %v682 = vunpack.c.l.b16 %v211
    %v683 = vunpack.c.h.b16 %v211
    %v684 = vunpack.c.l.b16 %v212
    %v685 = vunpack.c.l.b16 %v213
    %v686 = vunpack.c.h.b16 %v213
    %v687 = vunpack.c.l.b16 %v214
    %v688 = vunpack.c.l.b16 %v215
    %v689 = vunpack.c.h.b16 %v215
    %v690 = vunpack.c.l.b16 %v216
    %v691 = vunpack.c.l.b16 %v217
    %v692 = vunpack.c.h.b16 %v217
    %v693 = vunpack.c.l.b16 %v218
    %v694 = vunpack.c.l.b16 %v219
    %v695 = vunpack.c.h.b16 %v219
    %v696 = vunpack.c.l.b16 %v220
    %v697 = vunpack.c.l.b16 %v221
    %v698 = vunpack.c.h.b16 %v221
    %v699 = vunpack.c.l.b16 %v222
    %v700 = vunpack.c.l.b16 %v223
    %v701 = vunpack.c.h.b16 %v223
    %v702 = vunpack.c.l.b16 %v224
    %v703 = vunpack.c.l.b16 %v225
    %v704 = vunpack.c.h.b16 %v225
    %v705 = vunpack.c.l.b16 %v226
    %v706 = vunpack.c.l.b16 %v227
    %v707 = vunpack.c.h.b16 %v227
    %v708 = vunpack.c.l.b16 %v228
    %v709 = vunpack.c.l.b16 %v229
    %v710 = vunpack.c.h.b16 %v229
    %v711 = vunpack.c.l.b16 %v230
    %v712 = vunpack.c.l.b16 %v231
    %v713 = vunpack.c.h.b16 %v231
    %v714 = vunpack.c.l.b16 %v232
    %v715 = vunpack.c.l.b16 %v233
    %v716 = vunpack.c.h.b16 %v233
    %v717 = vunpack.c.l.b16 %v234
    %v718 = vunpack.c.l.b16 %v235
    %v719 = vunpack.c.h.b16 %v235
    %v720 = vunpack.c.l.b16 %v236
    %v721 = vunpack.c.l.b16 %v237
    %v722 = vunpack.c.h.b16 %v237
    %v723 = vunpack.c.l.b16 %v238
    %v724 = vunpack.c.l.b16 %v239
    %v725 = vunpack.c.h.b16 %v239
    %v726 = vunpack.c.l.b16 %v240
    %v727 = vunpack.c.l.b16 %v241
    %v728 = vunpack.c.h.b16 %v241
    %v729 = vunpack.c.l.b16 %v242
    %v730 = vunpack.c.l.b16 %v243
    %v731 = vunpack.c.h.b16 %v243
    %v732 = vunpack.c.l.b16 %v244
    %v733 = vunpack.c.l.b16 %v245
    %v734 = vunpack.c.h.b16 %v245
    %v735 = vunpack.c.l.b16 %v246
    %v736 = vunpack.c.l.b16 %v247
    %v737 = vunpack.c.h.b16 %v247
    %v738 = vunpack.c.l.b16 %v248
    %v739 = vunpack.c.l.b16 %v249
    %v740 = vunpack.c.h.b16 %v249
    %v741 = vunpack.c.l.b16 %v250
    %v742 = vunpack.c.l.b16 %v251
    %v743 = vunpack.c.h.b16 %v251
    %v744 = vunpack.c.l.b16 %v252
    %v745 = vunpack.c.l.b16 %v253
    %v746 = vunpack.c.h.b16 %v253
    %v747 = vunpack.c.l.b16 %v254
    %v748 = vunpack.c.l.b16 %v255
    %v749 = vunpack.c.h.b16 %v255
    %v750 = vunpack.c.l.b16 %v256
    %v751 = vunpack.c.l.b16 %v257
    %v752 = vunpack.c.h.b16 %v257
    %v753 = vunpack.c.l.b16 %v258
    %v754 = vunpack.c.l.b16 %v259
    %v755 = vunpack.c.h.b16 %v259
    %v756 = vunpack.c.l.b16 %v260
    %v757 = vunpack.c.l.b16 %v261
    %v758 = vunpack.c.h.b16 %v261
    %v759 = vunpack.c.l.b16 %v262
    %v760 = vunpack.c.l.b16 %v263
    %v761 = vunpack.c.h.b16 %v263
    %v762 = vunpack.c.l.b16 %v264
    %v763 = vunpack.c.l.b16 %v265
    %v764 = vunpack.c.h.b16 %v265
    %v765 = vunpack.c.l.b16 %v266
    %v766 = vunpack.c.l.b16 %v267
    %v767 = vunpack.c.h.b16 %v267
    %v768 = vunpack.c.l.b16 %v268
    %v769 = vunpack.c.l.b16 %v269
    %v770 = vunpack.c.h.b16 %v269
    %v771 = vunpack.c.l.b16 %v270
    %v772 = vunpack.c.l.b16 %v271
    %v773 = vunpack.c.h.b16 %v271
    %v774 = vunpack.c.l.b16 %v272
    %v775 = vunpack.c.l.b16 %v273
    %v776 = vunpack.c.h.b16 %v273
    %v777 = vunpack.c.l.b16 %v274
    %v778 = vunpack.c.l.b16 %v275
    %v779 = vunpack.c.h.b16 %v275
    %v780 = vunpack.c.l.b16 %v276
    %v781 = vunpack.c.l.b16 %v277
    %v782 = vunpack.c.h.b16 %v277
    %v783 = vunpack.c.l.b16 %v278
    %v784 = vunpack.c.l.b16 %v279
    %v785 = vunpack.c.h.b16 %v279
    %v786 = vunpack.c.l.b16 %v280
    %v787 = vunpack.c.l.b16 %v281
    %v788 = vunpack.c.h.b16 %v281
    %v789 = vunpack.c.l.b16 %v282
    %v790 = vpack.c.b16 %v499, %v496
    %v791 = vpack.c.b16 %v500, %v497
    %v792 = vpack.c.b16 %v501, %v498
    %v793 = vpack.c.b16 %v505, %v502
    %v794 = vpack.c.b16 %v506, %v503
    %v795 = vpack.c.b16 %v507, %v504
    %v796 = vpack.c.b16 %v511, %v508
    %v797 = vpack.c.b16 %v512, %v509
    %v798 = vpack.c.b16 %v513, %v510
    %v799 = vpack.c.b16 %v517, %v514
    %v800 = vpack.c.b16 %v518, %v515
    %v801 = vpack.c.b16 %v519, %v516
    %v802 = vpack.c.b16 %v523, %v520
    %v803 = vpack.c.b16 %v524, %v521
    %v804 = vpack.c.b16 %v525, %v522
    %v805 = vpack.c.b16 %v529, %v526
    %v806 = vpack.c.b16 %v530, %v527
    %v807 = vpack.c.b16 %v531, %v528
    %v808 = vpack.c.b16 %v535, %v532
    %v809 = vpack.c.b16 %v536, %v533
    %v810 = vpack.c.b16 %v537, %v534
    %v811 = vpack.c.b16 %v541, %v538
    %v812 = vpack.c.b16 %v542, %v539
    %v813 = vpack.c.b16 %v543, %v540
    %v814 = vpack.c.b16 %v547, %v544
    %v815 = vpack.c.b16 %v548, %v545
    %v816 = vpack.c.b16 %v549, %v546
    %v817 = vpack.c.b16 %v553, %v550
    %v818 = vpack.c.b16 %v554, %v551
    %v819 = vpack.c.b16 %v555, %v552
    %v820 = vpack.c.b16 %v559, %v556
    %v821 = vpack.c.b16 %v560, %v557
    %v822 = vpack.c.b16 %v561, %v558
    %v823 = vpack.c.b16 %v565, %v562
    %v824 = vpack.c.b16 %v566, %v563
    %v825 = vpack.c.b16 %v567, %v564
    %v826 = vpack.c.b16 %v571, %v568
    %v827 = vpack.c.b16 %v572, %v569
    %v828 = vpack.c.b16 %v573, %v570
    %v829 = vpack.c.b16 %v577, %v574
    %v830 = vpack.c.b16 %v578, %v575
    %v831 = vpack.c.b16 %v579, %v576
    %v832 = vpack.c.b16 %v583, %v580
    %v833 = vpack.c.b16 %v584, %v581
    %v834 = vpack.c.b16 %v585, %v582
    %v835 = vpack.c.b16 %v589, %v586
    %v836 = vpack.c.b16 %v590, %v587
    %v837 = vpack.c.b16 %v591, %v588
    %v838 = vpack.c.b16 %v595, %v592
    %v839 = vpack.c.b16 %v596, %v593
    %v840 = vpack.c.b16 %v597, %v594
    %v841 = vpack.c.b16 %v601, %v598
    %v842 = vpack.c.b16 %v602, %v599
    %v843 = vpack.c.b16 %v603, %v600
    %v844 = vpack.c.b16 %v607, %v604
    %v845 = vpack.c.b16 %v608, %v605
    %v846 = vpack.c.b16 %v609, %v606
    %v847 = vpack.c.b16 %v613, %v610
    %v848 = vpack.c.b16 %v614, %v611
    %v849 = vpack.c.b16 %v615, %v612
    %v850 = vpack.c.b16 %v619, %v616
    %v851 = vpack.c.b16 %v620, %v617
    %v852 = vpack.c.b16 %v621, %v618
    %v853 = vpack.c.b16 %v625, %v622
    %v854 = vpack.c.b16 %v626, %v623
    %v855 = vpack.c.b16 %v627, %v624
    %v856 = vpack.c.b16 %v631, %v628
    %v857 = vpack.c.b16 %v632, %v629
    %v858 = vpack.c.b16 %v633, %v630
    %v859 = vpack.c.b16 %v637, %v634
    %v860 = vpack.c.b16 %v638, %v635
    %v861 = vpack.c.b16 %v639, %v636
    %v862 = vpack.c.b16 %v643, %v640
    %v863 = vpack.c.b16 %v644, %v641
    %v864 = vpack.c.b16 %v645, %v642
    %v865 = vpack.c.b16 %v649, %v646
    %v866 = vpack.c.b16 %v650, %v647
    %v867 = vpack.c.b16 %v651, %v648
    %v868 = vpack.c.b16 %v655, %v652
    %v869 = vpack.c.b16 %v656, %v653
    %v870 = vpack.c.b16 %v657, %v654
    %v871 = vpack.c.b16 %v661, %v658
    %v872 = vpack.c.b16 %v662, %v659
    %v873 = vpack.c.b16 %v663, %v660
    %v874 = vpack.c.b16 %v667, %v664
    %v875 = vpack.c.b16 %v668, %v665
    %v876 = vpack.c.b16 %v669, %v666
    %v877 = vpack.c.b16 %v673, %v670
    %v878 = vpack.c.b16 %v674, %v671
    %v879 = vpack.c.b16 %v675, %v672
    %v880 = vpack.c.b16 %v679, %v676
    %v881 = vpack.c.b16 %v680, %v677
    %v882 = vpack.c.b16 %v681, %v678
    %v883 = vpack.c.b16 %v685, %v682
    %v884 = vpack.c.b16 %v686, %v683
    %v885 = vpack.c.b16 %v687, %v684
    %v886 = vpack.c.b16 %v691, %v688
    %v887 = vpack.c.b16 %v692, %v689
    %v888 = vpack.c.b16 %v693, %v690
    %v889 = vpack.c.b16 %v697, %v694
    %v890 = vpack.c.b16 %v698, %v695
    %v891 = vpack.c.b16 %v699, %v696
    %v892 = vpack.c.b16 %v703, %v700
    %v893 = vpack.c.b16 %v704, %v701
    %v894 = vpack.c.b16 %v705, %v702
    %v895 = vpack.c.b16 %v709, %v706
    %v896 = vpack.c.b16 %v710, %v707
    %v897 = vpack.c.b16 %v711, %v708
    %v898 = vpack.c.b16 %v715, %v712
    %v899 = vpack.c.b16 %v716, %v713
    %v900 = vpack.c.b16 %v717, %v714
    %v901 = vpack.c.b16 %v721, %v718
    %v902 = vpack.c.b16 %v722, %v719
    %v903 = vpack.c.b16 %v723, %v720
    %v904 = vpack.c.b16 %v727, %v724
    %v905 = vpack.c.b16 %v728, %v725
    %v906 = vpack.c.b16 %v729, %v726
    %v907 = vpack.c.b16 %v733, %v730
    %v908 = vpack.c.b16 %v734, %v731
    %v909 = vpack.c.b16 %v735, %v732
    %v910 = vpack.c.b16 %v739, %v736
    %v911 = vpack.c.b16 %v740, %v737
    %v912 = vpack.c.b16 %v741, %v738
    %v913 = vpack.c.b16 %v745, %v742
    %v914 = vpack.c.b16 %v746, %v743
    %v915 = vpack.c.b16 %v747, %v744
    %v916 = vpack.c.b16 %v751, %v748
    %v917 = vpack.c.b16 %v752, %v749
    %v918 = vpack.c.b16 %v753, %v750
    %v919 = vpack.c.b16 %v757, %v754
    %v920 = vpack.c.b16 %v758, %v755
    %v921 = vpack.c.b16 %v759, %v756
    %v922 = vpack.c.b16 %v763, %v760
    %v923 = vpack.c.b16 %v764, %v761
    %v924 = vpack.c.b16 %v765, %v762
    %v925 = vpack.c.b16 %v769, %v766
    %v926 = vpack.c.b16 %v770, %v767
    %v927 = vpack.c.b16 %v771, %v768
    %v928 = vpack.c.b16 %v775, %v772
    %v929 = vpack.c.b16 %v776, %v773
    %v930 = vpack.c.b16 %v777, %v774
    %v931 = vpack.c.b16 %v781, %v778
    %v932 = vpack.c.b16 %v782, %v779
    %v933 = vpack.c.b16 %v783, %v780
    %v934 = vpack.c.b16 %v787, %v784
    %v935 = vpack.c.b16 %v788, %v785
    %v936 = vpack.c.b16 %v789, %v786
    %vm1084 = vcmask 130048
    %v1086 = vsel %vm1084, %v86, 0
    %1088 = vmatprep.subr.bf16.mxu0 %v791
    %1089 = vmatpush1.bf16.msra.mxu0 %v790
    %1090 = vmatprep.subr.bf16.mxu0 %v794
    %1091 = vmatpush1.bf16.msra.mxu0 %v793
    %1092 = vmatprep.subr.bf16.mxu0 %v797
    %1093 = vmatpush1.bf16.msra.mxu0 %v796
    %1094 = vmatprep.subr.bf16.mxu0 %v800
    %1095 = vmatpush1.bf16.msra.mxu0 %v799
    %1096 = vmatprep.subr.bf16.mxu0 %v803
    %1097 = vmatpush1.bf16.msra.mxu0 %v802
    %1098 = vmatprep.subr.bf16.mxu0 %v806
    %1099 = vmatpush1.bf16.msra.mxu0 %v805
    %1100 = vmatprep.subr.bf16.mxu0 %v809
    %1101 = vmatpush1.bf16.msra.mxu0 %v808
    %1102 = vmatprep.subr.bf16.mxu0 %v812
    %1103 = vmatpush1.bf16.msra.mxu0 %v811
    %1104 = vmatprep.subr.bf16.mxu0 %v815
    %1105 = vmatpush1.bf16.msra.mxu0 %v814
    %1106 = vmatprep.subr.bf16.mxu0 %v818
    %1107 = vmatpush1.bf16.msra.mxu0 %v817
    %1108 = vmatprep.subr.bf16.mxu0 %v821
    %1109 = vmatpush1.bf16.msra.mxu0 %v820
    %1110 = vmatprep.subr.bf16.mxu0 %v824
    %1111 = vmatpush1.bf16.msra.mxu0 %v823
    %1112 = vmatprep.subr.bf16.mxu0 %v827
    %1113 = vmatpush1.bf16.msra.mxu0 %v826
    %1114 = vmatprep.subr.bf16.mxu0 %v830
    %1115 = vmatpush1.bf16.msra.mxu0 %v829
    %1116 = vmatprep.subr.bf16.mxu0 %v833
    %1117 = vmatpush1.bf16.msra.mxu0 %v832
    %1118 = vmatprep.subr.bf16.mxu0 %v836
    %1119 = vmatpush1.bf16.msra.mxu0 %v835
    %1120 = vmatprep.mubr.bf16.mxu0 %v81
    %1121 = vmatmul.mubr.bf16.gmra.mrb[0].mxu0 %v80
    %v1122 = vpop.f32.mrb[0].mxu0
    %v1123 = vadd.f32 %v288, %v1122
    %v1124 = vpop.f32.mrb[0].mxu0
    %v1125 = vadd.f32 %v292, %v1124
    %v1126 = vpop.f32.mrb[0].mxu0
    %v1127 = vpop.f32.mrb[0].mxu0
    %1128 = vdwg.mxu0
    %1129 = vmatprep.subr.bf16.mxu0 %v839
    %1130 = vmatpush1.bf16.msra.mxu0 %v838
    %1131 = vmatprep.subr.bf16.mxu0 %v842
    %1132 = vmatpush1.bf16.msra.mxu0 %v841
    %1133 = vmatprep.subr.bf16.mxu0 %v845
    %1134 = vmatpush1.bf16.msra.mxu0 %v844
    %1135 = vmatprep.subr.bf16.mxu0 %v848
    %1136 = vmatpush1.bf16.msra.mxu0 %v847
    %1137 = vmatprep.subr.bf16.mxu0 %v851
    %1138 = vmatpush1.bf16.msra.mxu0 %v850
    %1139 = vmatprep.subr.bf16.mxu0 %v854
    %1140 = vmatpush1.bf16.msra.mxu0 %v853
    %1141 = vmatprep.subr.bf16.mxu0 %v857
    %1142 = vmatpush1.bf16.msra.mxu0 %v856
    %1143 = vmatprep.subr.bf16.mxu0 %v860
    %1144 = vmatpush1.bf16.msra.mxu0 %v859
    %1145 = vmatprep.subr.bf16.mxu0 %v863
    %1146 = vmatpush1.bf16.msra.mxu0 %v862
    %1147 = vmatprep.subr.bf16.mxu0 %v866
    %1148 = vmatpush1.bf16.msra.mxu0 %v865
    %1149 = vmatprep.subr.bf16.mxu0 %v869
    %1150 = vmatpush1.bf16.msra.mxu0 %v868
    %1151 = vmatprep.subr.bf16.mxu0 %v872
    %1152 = vmatpush1.bf16.msra.mxu0 %v871
    %1153 = vmatprep.subr.bf16.mxu0 %v875
    %1154 = vmatpush1.bf16.msra.mxu0 %v874
    %1155 = vmatprep.subr.bf16.mxu0 %v878
    %1156 = vmatpush1.bf16.msra.mxu0 %v877
    %1157 = vmatprep.subr.bf16.mxu0 %v881
    %1158 = vmatpush1.bf16.msra.mxu0 %v880
    %1159 = vmatprep.subr.bf16.mxu0 %v884
    %1160 = vmatpush1.bf16.msra.mxu0 %v883
    %1161 = vmatprep.mubr.bf16.mxu0 %v83
    %1162 = vmatmul.mubr.bf16.gmra.mrb[0].mxu0 %v82
    %v1163 = vpop.f32.mrb[0].mxu0
    %v1164 = vadd.f32 %v1123, %v1163
    %v1165 = vpop.f32.mrb[0].mxu0
    %v1166 = vadd.f32 %v1125, %v1165
    %v1167 = vpop.f32.mrb[0].mxu0
    %v1168 = vpop.f32.mrb[0].mxu0
    %1169 = vdwg.mxu0
    %1170 = vmatprep.subr.bf16.mxu0 %v887
    %1171 = vmatpush1.bf16.msra.mxu0 %v886
    %1172 = vmatprep.subr.bf16.mxu0 %v890
    %1173 = vmatpush1.bf16.msra.mxu0 %v889
    %1174 = vmatprep.subr.bf16.mxu0 %v893
    %1175 = vmatpush1.bf16.msra.mxu0 %v892
    %1176 = vmatprep.subr.bf16.mxu0 %v896
    %1177 = vmatpush1.bf16.msra.mxu0 %v895
    %1178 = vmatprep.subr.bf16.mxu0 %v899
    %1179 = vmatpush1.bf16.msra.mxu0 %v898
    %1180 = vmatprep.subr.bf16.mxu0 %v902
    %1181 = vmatpush1.bf16.msra.mxu0 %v901
    %1182 = vmatprep.subr.bf16.mxu0 %v905
    %1183 = vmatpush1.bf16.msra.mxu0 %v904
    %1184 = vmatprep.subr.bf16.mxu0 %v908
    %1185 = vmatpush1.bf16.msra.mxu0 %v907
    %1186 = vmatprep.subr.bf16.mxu0 %v911
    %1187 = vmatpush1.bf16.msra.mxu0 %v910
    %1188 = vmatprep.subr.bf16.mxu0 %v914
    %1189 = vmatpush1.bf16.msra.mxu0 %v913
    %1190 = vmatprep.subr.bf16.mxu0 %v917
    %1191 = vmatpush1.bf16.msra.mxu0 %v916
    %1192 = vmatprep.subr.bf16.mxu0 %v920
    %1193 = vmatpush1.bf16.msra.mxu0 %v919
    %1194 = vmatprep.subr.bf16.mxu0 %v923
    %1195 = vmatpush1.bf16.msra.mxu0 %v922
    %1196 = vmatprep.subr.bf16.mxu0 %v926
    %1197 = vmatpush1.bf16.msra.mxu0 %v925
    %1198 = vmatprep.subr.bf16.mxu0 %v929
    %1199 = vmatpush1.bf16.msra.mxu0 %v928
    %1200 = vmatprep.subr.bf16.mxu0 %v932
    %1201 = vmatpush1.bf16.msra.mxu0 %v931
    %1202 = vmatprep.mubr.bf16.mxu0 %v85
    %1203 = vmatmul.mubr.bf16.gmra.mrb[0].mxu0 %v84
    %v1204 = vpop.f32.mrb[0].mxu0
    %v1205 = vadd.f32 %v1164, %v1204
    %v1206 = vpop.f32.mrb[0].mxu0
    %v1207 = vadd.f32 %v1166, %v1206
    %v1208 = vpop.f32.mrb[0].mxu0
    %v1209 = vpop.f32.mrb[0].mxu0
    %1210 = vdwg.mxu0
    %1211 = vmatprep.subr.bf16.mxu0 %v935
    %1212 = vmatpush1.bf16.msra.mxu0 %v934
    %1213 = vmatprep.subr.bf16.mxu0 0
    %1214 = vmatpush1.bf16.msra.mxu0 0
    %1215 = vmatprep.subr.bf16.mxu0 0
    %1216 = vmatpush1.bf16.msra.mxu0 0
    %1217 = vmatprep.subr.bf16.mxu0 0
    %1218 = vmatpush1.bf16.msra.mxu0 0
    %1219 = vmatprep.subr.bf16.mxu0 0
    %1220 = vmatpush1.bf16.msra.mxu0 0
    %1221 = vmatprep.subr.bf16.mxu0 0
    %1222 = vmatpush1.bf16.msra.mxu0 0
    %1223 = vmatprep.subr.bf16.mxu0 0
    %1224 = vmatpush1.bf16.msra.mxu0 0
    %1225 = vmatprep.subr.bf16.mxu0 0
    %1226 = vmatpush1.bf16.msra.mxu0 0
    %1227 = vmatprep.subr.bf16.mxu0 0
    %1228 = vmatpush1.bf16.msra.mxu0 0
    %1229 = vmatprep.subr.bf16.mxu0 0
    %1230 = vmatpush1.bf16.msra.mxu0 0
    %1231 = vmatprep.subr.bf16.mxu0 0
    %1232 = vmatpush1.bf16.msra.mxu0 0
    %1233 = vmatprep.subr.bf16.mxu0 0
    %1234 = vmatpush1.bf16.msra.mxu0 0
    %1235 = vmatprep.subr.bf16.mxu0 0
    %1236 = vmatpush1.bf16.msra.mxu0 0
    %1237 = vmatprep.subr.bf16.mxu0 0
    %1238 = vmatpush1.bf16.msra.mxu0 0
    %1239 = vmatprep.subr.bf16.mxu0 0
    %1240 = vmatpush1.bf16.msra.mxu0 0
    %1241 = vmatprep.subr.bf16.mxu0 0
    %1242 = vmatpush1.bf16.msra.mxu0 0
    %1243 = vmatprep.mubr.bf16.mxu0 0
    %1244 = vmatmul.mubr.bf16.gmra.mrb[0].mxu0 %v1086
    %v1245 = vpop.f32.mrb[0].mxu0
    %v1246 = vadd.f32 %v1205, %v1245
    %v1247 = vpop.f32.mrb[0].mxu0
    %v1248 = vadd.f32 %v1207, %v1247
    %v1249 = vpop.f32.mrb[0].mxu0
    %v1250 = vpop.f32.mrb[0].mxu0
    %1251 = vdwg.mxu0
    %1252 = vmatprep.subr.bf16.mxu0 0
    %1253 = vmatpush1.bf16.msra.mxu0 %v792
    %1254 = vmatprep.subr.bf16.mxu0 0
    %1255 = vmatpush1.bf16.msra.mxu0 %v795
    %1256 = vmatprep.subr.bf16.mxu0 0
    %1257 = vmatpush1.bf16.msra.mxu0 %v798
    %1258 = vmatprep.subr.bf16.mxu0 0
    %1259 = vmatpush1.bf16.msra.mxu0 %v801
    %1260 = vmatprep.subr.bf16.mxu0 0
    %1261 = vmatpush1.bf16.msra.mxu0 %v804
    %1262 = vmatprep.subr.bf16.mxu0 0
    %1263 = vmatpush1.bf16.msra.mxu0 %v807
    %1264 = vmatprep.subr.bf16.mxu0 0
    %1265 = vmatpush1.bf16.msra.mxu0 %v810
    %1266 = vmatprep.subr.bf16.mxu0 0
    %1267 = vmatpush1.bf16.msra.mxu0 %v813
    %1268 = vmatprep.subr.bf16.mxu0 0
    %1269 = vmatpush1.bf16.msra.mxu0 %v816
    %1270 = vmatprep.subr.bf16.mxu0 0
    %1271 = vmatpush1.bf16.msra.mxu0 %v819
    %1272 = vmatprep.subr.bf16.mxu0 0
    %1273 = vmatpush1.bf16.msra.mxu0 %v822
    %1274 = vmatprep.subr.bf16.mxu0 0
    %1275 = vmatpush1.bf16.msra.mxu0 %v825
    %1276 = vmatprep.subr.bf16.mxu0 0
    %1277 = vmatpush1.bf16.msra.mxu0 %v828
    %1278 = vmatprep.subr.bf16.mxu0 0
    %1279 = vmatpush1.bf16.msra.mxu0 %v831
    %1280 = vmatprep.subr.bf16.mxu0 0
    %1281 = vmatpush1.bf16.msra.mxu0 %v834
    %1282 = vmatprep.subr.bf16.mxu0 0
    %1283 = vmatpush1.bf16.msra.mxu0 %v837
    %1284 = vmatprep.mubr.bf16.mxu0 %v81
    %1285 = vmatmul.mubr.bf16.gmra.mrb[0].mxu0 %v80
    %v1286 = vpop.f32.mrb[0].mxu0
    %v1287 = vadd.f32 %v296, %v1286
    %v1288 = vpop.f32.mrb[0].mxu0
    %v1289 = vpop.f32.mrb[0].mxu0
    %v1290 = vpop.f32.mrb[0].mxu0
    %1291 = vdwg.mxu0
    %1292 = vmatprep.subr.bf16.mxu0 0
    %1293 = vmatpush1.bf16.msra.mxu0 %v840
    %1294 = vmatprep.subr.bf16.mxu0 0
    %1295 = vmatpush1.bf16.msra.mxu0 %v843
    %1296 = vmatprep.subr.bf16.mxu0 0
    %1297 = vmatpush1.bf16.msra.mxu0 %v846
    %1298 = vmatprep.subr.bf16.mxu0 0
    %1299 = vmatpush1.bf16.msra.mxu0 %v849
    %1300 = vmatprep.subr.bf16.mxu0 0
    %1301 = vmatpush1.bf16.msra.mxu0 %v852
    %1302 = vmatprep.subr.bf16.mxu0 0
    %1303 = vmatpush1.bf16.msra.mxu0 %v855
    %1304 = vmatprep.subr.bf16.mxu0 0
    %1305 = vmatpush1.bf16.msra.mxu0 %v858
    %1306 = vmatprep.subr.bf16.mxu0 0
    %1307 = vmatpush1.bf16.msra.mxu0 %v861
    %1308 = vmatprep.subr.bf16.mxu0 0
    %1309 = vmatpush1.bf16.msra.mxu0 %v864
    %1310 = vmatprep.subr.bf16.mxu0 0
    %1311 = vmatpush1.bf16.msra.mxu0 %v867
    %1312 = vmatprep.subr.bf16.mxu0 0
    %1313 = vmatpush1.bf16.msra.mxu0 %v870
    %1314 = vmatprep.subr.bf16.mxu0 0
    %1315 = vmatpush1.bf16.msra.mxu0 %v873
    %1316 = vmatprep.subr.bf16.mxu0 0
    %1317 = vmatpush1.bf16.msra.mxu0 %v876
    %1318 = vmatprep.subr.bf16.mxu0 0
    %1319 = vmatpush1.bf16.msra.mxu0 %v879
    %1320 = vmatprep.subr.bf16.mxu0 0
    %1321 = vmatpush1.bf16.msra.mxu0 %v882
    %1322 = vmatprep.subr.bf16.mxu0 0
    %1323 = vmatpush1.bf16.msra.mxu0 %v885
    %1324 = vmatprep.mubr.bf16.mxu0 %v83
    %1325 = vmatmul.mubr.bf16.gmra.mrb[0].mxu0 %v82
    %v1326 = vpop.f32.mrb[0].mxu0
    %v1327 = vadd.f32 %v1287, %v1326
    %v1328 = vpop.f32.mrb[0].mxu0
    %v1329 = vpop.f32.mrb[0].mxu0
    %v1330 = vpop.f32.mrb[0].mxu0
    %1331 = vdwg.mxu0
    %1332 = vmatprep.subr.bf16.mxu0 0
    %1333 = vmatpush1.bf16.msra.mxu0 %v888
    %1334 = vmatprep.subr.bf16.mxu0 0
    %1335 = vmatpush1.bf16.msra.mxu0 %v891
    %1336 = vmatprep.subr.bf16.mxu0 0
    %1337 = vmatpush1.bf16.msra.mxu0 %v894
    %1338 = vmatprep.subr.bf16.mxu0 0
    %1339 = vmatpush1.bf16.msra.mxu0 %v897
    %1340 = vmatprep.subr.bf16.mxu0 0
    %1341 = vmatpush1.bf16.msra.mxu0 %v900
    %1342 = vmatprep.subr.bf16.mxu0 0
    %1343 = vmatpush1.bf16.msra.mxu0 %v903
    %1344 = vmatprep.subr.bf16.mxu0 0
    %1345 = vmatpush1.bf16.msra.mxu0 %v906
    %1346 = vmatprep.subr.bf16.mxu0 0
    %1347 = vmatpush1.bf16.msra.mxu0 %v909
    %1348 = vmatprep.subr.bf16.mxu0 0
    %1349 = vmatpush1.bf16.msra.mxu0 %v912
    %1350 = vmatprep.subr.bf16.mxu0 0
    %1351 = vmatpush1.bf16.msra.mxu0 %v915
    %1352 = vmatprep.subr.bf16.mxu0 0
    %1353 = vmatpush1.bf16.msra.mxu0 %v918
    %1354 = vmatprep.subr.bf16.mxu0 0
    %1355 = vmatpush1.bf16.msra.mxu0 %v921
    %1356 = vmatprep.subr.bf16.mxu0 0
    %1357 = vmatpush1.bf16.msra.mxu0 %v924
    %1358 = vmatprep.subr.bf16.mxu0 0
    %1359 = vmatpush1.bf16.msra.mxu0 %v927
    %1360 = vmatprep.subr.bf16.mxu0 0
    %1361 = vmatpush1.bf16.msra.mxu0 %v930
    %1362 = vmatprep.subr.bf16.mxu0 0
    %1363 = vmatpush1.bf16.msra.mxu0 %v933
    %1364 = vmatprep.mubr.bf16.mxu0 %v85
    %1365 = vmatmul.mubr.bf16.gmra.mrb[0].mxu0 %v84
    %v1366 = vpop.f32.mrb[0].mxu0
    %v1367 = vadd.f32 %v1327, %v1366
    %v1368 = vpop.f32.mrb[0].mxu0
    %v1369 = vpop.f32.mrb[0].mxu0
    %v1370 = vpop.f32.mrb[0].mxu0
    %1371 = vdwg.mxu0
    %1372 = vmatprep.subr.bf16.mxu0 0
    %1373 = vmatpush1.bf16.msra.mxu0 %v936
    %1374 = vmatprep.subr.bf16.mxu0 0
    %1375 = vmatpush1.bf16.msra.mxu0 0
    %1376 = vmatprep.subr.bf16.mxu0 0
    %1377 = vmatpush1.bf16.msra.mxu0 0
    %1378 = vmatprep.subr.bf16.mxu0 0
    %1379 = vmatpush1.bf16.msra.mxu0 0
    %1380 = vmatprep.subr.bf16.mxu0 0
    %1381 = vmatpush1.bf16.msra.mxu0 0
    %1382 = vmatprep.subr.bf16.mxu0 0
    %1383 = vmatpush1.bf16.msra.mxu0 0
    %1384 = vmatprep.subr.bf16.mxu0 0
    %1385 = vmatpush1.bf16.msra.mxu0 0
    %1386 = vmatprep.subr.bf16.mxu0 0
    %1387 = vmatpush1.bf16.msra.mxu0 0
    %1388 = vmatprep.subr.bf16.mxu0 0
    %1389 = vmatpush1.bf16.msra.mxu0 0
    %1390 = vmatprep.subr.bf16.mxu0 0
    %1391 = vmatpush1.bf16.msra.mxu0 0
    %1392 = vmatprep.subr.bf16.mxu0 0
    %1393 = vmatpush1.bf16.msra.mxu0 0
    %1394 = vmatprep.subr.bf16.mxu0 0
    %1395 = vmatpush1.bf16.msra.mxu0 0
    %1396 = vmatprep.subr.bf16.mxu0 0
    %1397 = vmatpush1.bf16.msra.mxu0 0
    %1398 = vmatprep.subr.bf16.mxu0 0
    %1399 = vmatpush1.bf16.msra.mxu0 0
    %1400 = vmatprep.subr.bf16.mxu0 0
    %1401 = vmatpush1.bf16.msra.mxu0 0
    %1402 = vmatprep.subr.bf16.mxu0 0
    %1403 = vmatpush1.bf16.msra.mxu0 0
    %1404 = vmatprep.mubr.bf16.mxu0 0
    %1405 = vmatmul.mubr.bf16.gmra.mrb[0].mxu0 %v1086
    %v1406 = vpop.f32.mrb[0].mxu0
    %v1407 = vadd.f32 %v1367, %v1406
    %v1408 = vpop.f32.mrb[0].mxu0
    %v1409 = vpop.f32.mrb[0].mxu0
    %v1410 = vpop.f32.mrb[0].mxu0
    %1411 = vdwg.mxu0
    %v1412 = vmax.f32 %v1246, 0.0
    %v1413 = vmax.f32 %v1248, 0.0
    %v1414 = vmax.f32 %v1407, 0.0
    %v1415 = vpack.c.bf16 %v1412, %v1412
    %v1416 = vpack.c.bf16 %v1413, %v1413
    %v1417 = vpack.c.bf16 %v1414, %v1414
    %v1418 = vld [vmem:[%s3] sm:$0xf]
    %v1419 = vld [vmem:[%s3 + $0x4] sm:$0xf]
    %v1420 = vld [vmem:[%s3 + $0x8] sm:$0xf]
    %v1421 = vld [vmem:[%s3 + $0xc] sm:$0xf]
    %v1422 = vld [vmem:[%s3 + $0x10] sm:$0xf]
    %v1423 = vld [vmem:[%s3 + $0x14] sm:$0xf]
    %v1424 = vld [vmem:[%s3 + $0x18] sm:$0xf]
    %v1425 = vld [vmem:[%s3 + $0x1c] sm:$0xf]
    %v1426 = vld [vmem:[%s3 + $0x20] sm:$0xf]
    %v1427 = vld [vmem:[%s3 + $0x24] sm:$0xf]
    %v1428 = vld [vmem:[%s3 + $0x28] sm:$0xf]
    %v1429 = vld [vmem:[%s3 + $0x2c] sm:$0xf]
    %v1430 = vld [vmem:[%s3 + $0x30] sm:$0xf]
    %v1431 = vld [vmem:[%s3 + $0x34] sm:$0xf]
    %v1432 = vld [vmem:[%s3 + $0x38] sm:$0xf]
    %v1433 = vld [vmem:[%s3 + $0x3c] sm:$0xf]
    %v1434 = vld [vmem:[%s3 + $0x40] sm:$0xf]
    %v1435 = vld [vmem:[%s3 + $0x44] sm:$0xf]
    %v1436 = vld [vmem:[%s3 + $0x48] sm:$0xf]
    %v1437 = vld [vmem:[%s3 + $0x4c] sm:$0xf]
    %v1438 = vld [vmem:[%s3 + $0x50] sm:$0xf]
    %v1439 = vld [vmem:[%s3 + $0x54] sm:$0xf]
    %v1440 = vld [vmem:[%s3 + $0x58] sm:$0xf]
    %v1441 = vld [vmem:[%s3 + $0x5c] sm:$0xf]
    %v1442 = vld [vmem:[%s3 + $0x60] sm:$0xf]
    %v1443 = vld [vmem:[%s3 + $0x64] sm:$0xf]
    %v1444 = vld [vmem:[%s3 + $0x68] sm:$0xf]
    %v1445 = vld [vmem:[%s3 + $0x6c] sm:$0xf]
    %v1446 = vld [vmem:[%s3 + $0x70] sm:$0xf]
    %v1447 = vld [vmem:[%s3 + $0x74] sm:$0xf]
    %v1448 = vld [vmem:[%s3 + $0x78] sm:$0xf]
    %v1449 = vld [vmem:[%s3 + $0x7c] sm:$0xf]
    %v1450 = vld [vmem:[%s3 + $0x80] sm:$0xf]
    %v1451 = vld [vmem:[%s3 + $0x84] sm:$0xf]
    %v1452 = vld [vmem:[%s3 + $0x88] sm:$0xf]
    %v1453 = vld [vmem:[%s3 + $0x8c] sm:$0xf]
    %v1454 = vld [vmem:[%s3 + $0x90] sm:$0xf]
    %v1455 = vld [vmem:[%s3 + $0x94] sm:$0xf]
    %v1456 = vld [vmem:[%s3 + $0x98] sm:$0xf]
    %v1457 = vld [vmem:[%s3 + $0x9c] sm:$0xf]
    %v1458 = vld [vmem:[%s3 + $0xa0] sm:$0xf]
    %v1459 = vld [vmem:[%s3 + $0xa4] sm:$0xf]
    %v1460 = vld [vmem:[%s3 + $0xa8] sm:$0xf]
    %v1461 = vld [vmem:[%s3 + $0xac] sm:$0xf]
    %v1462 = vld [vmem:[%s3 + $0xb0] sm:$0xf]
    %v1463 = vld [vmem:[%s3 + $0xb4] sm:$0xf]
    %v1464 = vld [vmem:[%s3 + $0xb8] sm:$0xf]
    %v1465 = vld [vmem:[%s3 + $0xbc] sm:$0xf]
    %v1466 = vld [vmem:[%s4] sm:$0x1]
    %v1468 = vlaneseq
    %v1469 = vshrl.u32 %v1468, 7
    %v1470 = vsub.s32 0, %v1469
    %v1471 = vrot.slane %v1466, %v1470
    %v1521 = vunpack.c.l.b16 %v1418
    %v1522 = vunpack.c.l.b16 %v1419
    %v1523 = vunpack.c.l.b16 %v1420
    %v1524 = vunpack.c.l.b16 %v1421
    %v1525 = vunpack.c.l.b16 %v1422
    %v1526 = vunpack.c.l.b16 %v1423
    %v1527 = vunpack.c.l.b16 %v1424
    %v1528 = vunpack.c.l.b16 %v1425
    %v1529 = vunpack.c.l.b16 %v1426
    %v1530 = vunpack.c.l.b16 %v1427
    %v1531 = vunpack.c.l.b16 %v1428
    %v1532 = vunpack.c.l.b16 %v1429
    %v1533 = vunpack.c.l.b16 %v1430
    %v1534 = vunpack.c.l.b16 %v1431
    %v1535 = vunpack.c.l.b16 %v1432
    %v1536 = vunpack.c.l.b16 %v1433
    %v1537 = vunpack.c.l.b16 %v1434
    %v1538 = vunpack.c.l.b16 %v1435
    %v1539 = vunpack.c.l.b16 %v1436
    %v1540 = vunpack.c.l.b16 %v1437
    %v1541 = vunpack.c.l.b16 %v1438
    %v1542 = vunpack.c.l.b16 %v1439
    %v1543 = vunpack.c.l.b16 %v1440
    %v1544 = vunpack.c.l.b16 %v1441
    %v1545 = vunpack.c.l.b16 %v1442
    %v1546 = vunpack.c.l.b16 %v1443
    %v1547 = vunpack.c.l.b16 %v1444
    %v1548 = vunpack.c.l.b16 %v1445
    %v1549 = vunpack.c.l.b16 %v1446
    %v1550 = vunpack.c.l.b16 %v1447
    %v1551 = vunpack.c.l.b16 %v1448
    %v1552 = vunpack.c.l.b16 %v1449
    %v1553 = vunpack.c.l.b16 %v1450
    %v1554 = vunpack.c.l.b16 %v1451
    %v1555 = vunpack.c.l.b16 %v1452
    %v1556 = vunpack.c.l.b16 %v1453
    %v1557 = vunpack.c.l.b16 %v1454
    %v1558 = vunpack.c.l.b16 %v1455
    %v1559 = vunpack.c.l.b16 %v1456
    %v1560 = vunpack.c.l.b16 %v1457
    %v1561 = vunpack.c.l.b16 %v1458
    %v1562 = vunpack.c.l.b16 %v1459
    %v1563 = vunpack.c.l.b16 %v1460
    %v1564 = vunpack.c.l.b16 %v1461
    %v1565 = vunpack.c.l.b16 %v1462
    %v1566 = vunpack.c.l.b16 %v1463
    %v1567 = vunpack.c.l.b16 %v1464
    %v1568 = vunpack.c.l.b16 %v1465
    %v1569 = vpack.c.b16 %v1522, %v1521
    %v1570 = vpack.c.b16 %v1524, %v1523
    %v1571 = vpack.c.b16 %v1526, %v1525
    %v1572 = vpack.c.b16 %v1528, %v1527
    %v1573 = vpack.c.b16 %v1530, %v1529
    %v1574 = vpack.c.b16 %v1532, %v1531
    %v1575 = vpack.c.b16 %v1534, %v1533
    %v1576 = vpack.c.b16 %v1536, %v1535
    %v1577 = vpack.c.b16 %v1538, %v1537
    %v1578 = vpack.c.b16 %v1540, %v1539
    %v1579 = vpack.c.b16 %v1542, %v1541
    %v1580 = vpack.c.b16 %v1544, %v1543
    %v1581 = vpack.c.b16 %v1546, %v1545
    %v1582 = vpack.c.b16 %v1548, %v1547
    %v1583 = vpack.c.b16 %v1550, %v1549
    %v1584 = vpack.c.b16 %v1552, %v1551
    %v1585 = vpack.c.b16 %v1554, %v1553
    %v1586 = vpack.c.b16 %v1556, %v1555
    %v1587 = vpack.c.b16 %v1558, %v1557
    %v1588 = vpack.c.b16 %v1560, %v1559
    %v1589 = vpack.c.b16 %v1562, %v1561
    %v1590 = vpack.c.b16 %v1564, %v1563
    %v1591 = vpack.c.b16 %v1566, %v1565
    %v1592 = vpack.c.b16 %v1568, %v1567
    %1617 = vmatprep.subr.bf16.mxu0 0
    %1618 = vmatpush1.bf16.msra.mxu0 %v1569
    %1619 = vmatprep.subr.bf16.mxu0 0
    %1620 = vmatpush1.bf16.msra.mxu0 %v1570
    %1621 = vmatprep.subr.bf16.mxu0 0
    %1622 = vmatpush1.bf16.msra.mxu0 %v1571
    %1623 = vmatprep.subr.bf16.mxu0 0
    %1624 = vmatpush1.bf16.msra.mxu0 %v1572
    %1625 = vmatprep.subr.bf16.mxu0 0
    %1626 = vmatpush1.bf16.msra.mxu0 %v1573
    %1627 = vmatprep.subr.bf16.mxu0 0
    %1628 = vmatpush1.bf16.msra.mxu0 %v1574
    %1629 = vmatprep.subr.bf16.mxu0 0
    %1630 = vmatpush1.bf16.msra.mxu0 %v1575
    %1631 = vmatprep.subr.bf16.mxu0 0
    %1632 = vmatpush1.bf16.msra.mxu0 %v1576
    %1633 = vmatprep.subr.bf16.mxu0 0
    %1634 = vmatpush1.bf16.msra.mxu0 %v1577
    %1635 = vmatprep.subr.bf16.mxu0 0
    %1636 = vmatpush1.bf16.msra.mxu0 %v1578
    %1637 = vmatprep.subr.bf16.mxu0 0
    %1638 = vmatpush1.bf16.msra.mxu0 %v1579
    %1639 = vmatprep.subr.bf16.mxu0 0
    %1640 = vmatpush1.bf16.msra.mxu0 %v1580
    %1641 = vmatprep.subr.bf16.mxu0 0
    %1642 = vmatpush1.bf16.msra.mxu0 %v1581
    %1643 = vmatprep.subr.bf16.mxu0 0
    %1644 = vmatpush1.bf16.msra.mxu0 %v1582
    %1645 = vmatprep.subr.bf16.mxu0 0
    %1646 = vmatpush1.bf16.msra.mxu0 %v1583
    %1647 = vmatprep.subr.bf16.mxu0 0
    %1648 = vmatpush1.bf16.msra.mxu0 %v1584
    %1649 = vmatprep.mubr.bf16.mxu0 %v1416
    %1650 = vmatmul.mubr.bf16.gmra.mrb[0].mxu0 %v1415
    %v1651 = vpop.f32.mrb[0].mxu0
    %v1652 = vadd.f32 %v1471, %v1651
    %v1653 = vpop.f32.mrb[0].mxu0
    %v1654 = vpop.f32.mrb[0].mxu0
    %v1655 = vpop.f32.mrb[0].mxu0
    %1656 = vdwg.mxu0
    %1657 = vmatprep.subr.bf16.mxu0 0
    %1658 = vmatpush1.bf16.msra.mxu0 %v1585
    %1659 = vmatprep.subr.bf16.mxu0 0
    %1660 = vmatpush1.bf16.msra.mxu0 %v1586
    %1661 = vmatprep.subr.bf16.mxu0 0
    %1662 = vmatpush1.bf16.msra.mxu0 %v1587
    %1663 = vmatprep.subr.bf16.mxu0 0
    %1664 = vmatpush1.bf16.msra.mxu0 %v1588
    %1665 = vmatprep.subr.bf16.mxu0 0
    %1666 = vmatpush1.bf16.msra.mxu0 %v1589
    %1667 = vmatprep.subr.bf16.mxu0 0
    %1668 = vmatpush1.bf16.msra.mxu0 %v1590
    %1669 = vmatprep.subr.bf16.mxu0 0
    %1670 = vmatpush1.bf16.msra.mxu0 %v1591
    %1671 = vmatprep.subr.bf16.mxu0 0
    %1672 = vmatpush1.bf16.msra.mxu0 %v1592
    %1673 = vmatprep.subr.bf16.mxu0 0
    %1674 = vmatpush1.bf16.msra.mxu0 0
    %1675 = vmatprep.subr.bf16.mxu0 0
    %1676 = vmatpush1.bf16.msra.mxu0 0
    %1677 = vmatprep.subr.bf16.mxu0 0
    %1678 = vmatpush1.bf16.msra.mxu0 0
    %1679 = vmatprep.subr.bf16.mxu0 0
    %1680 = vmatpush1.bf16.msra.mxu0 0
    %1681 = vmatprep.subr.bf16.mxu0 0
    %1682 = vmatpush1.bf16.msra.mxu0 0
    %1683 = vmatprep.subr.bf16.mxu0 0
    %1684 = vmatpush1.bf16.msra.mxu0 0
    %1685 = vmatprep.subr.bf16.mxu0 0
    %1686 = vmatpush1.bf16.msra.mxu0 0
    %1687 = vmatprep.subr.bf16.mxu0 0
    %1688 = vmatpush1.bf16.msra.mxu0 0
    %1689 = vmatprep.mubr.bf16.mxu0 0
    %1690 = vmatmul.mubr.bf16.gmra.mrb[0].mxu0 %v1417
    %v1691 = vpop.f32.mrb[0].mxu0
    %v1692 = vadd.f32 %v1652, %v1691
    %v1693 = vpop.f32.mrb[0].mxu0
    %v1694 = vpop.f32.mrb[0].mxu0
    %v1695 = vpop.f32.mrb[0].mxu0
    %1696 = vdwg.mxu0
    %vm1697 = vcmask 74752
    %1698 = vst.msk [vmem:[#allocation5] sm:$0x3] %vm1697, %v1692
    // Predicated region
    $region26: #{single_layer_cnn.1} parent=1 // pred_check
      _
    $region27: #{single_layer_cnn.1} parent=1 // pred_check_branch
      %1700 = sbr.rel (0) target = $region29
    $region28: #{single_layer_cnn.1} parent=1 // pred_region
      %s1702 = ssub.s32 32, 32
      %1703 = vsyncadd [#allocation4], %s1702
      %s1705 = sshll.u32 [#allocation5], 4
      %s1706 = int_to_ptr.vmem [resolvable:$true] %s1705
      %1708 = dma.vmem_to_hbm [thread:$0]  %s1706, 32, %s5, [#allocation4]
    $region29: #{single_layer_cnn.1} parent=1 // pred_fallthru
      _
    // Predicated region
    $region30: #{single_layer_cnn.1} parent=1 // pred_check
      _
    $region31: #{single_layer_cnn.1} parent=1 // pred_check_branch
      %1710 = sbr.rel (0) target = $region33
    $region32: #{single_layer_cnn.1} parent=1 // pred_region
      %1711 = dma.done [#allocation4], 32
    $region33: #{single_layer_cnn.1} parent=1 // pred_fallthru
      _
    %1712 = vsyncpa [#allocation3], 1
    %1713 = vsyncpa [#allocation4], 1

</llo_original>
